<compile_context>
chip_gen: v6e
topology: v6e:2x2x1
jax: 0.10.0
libtpu: 0.0.40
codegen_flags: <defaults>
</compile_context>

<pallas_src>
import jax
import jax.numpy as jnp
from jax.experimental import pallas as pl
from jax.experimental.pallas import tpu as pltpu

MAX_POSITIONS = 16384


def _make_inv_freq(dim):
    # Exactly mirrors the torch __init__ construction (and the reference below).
    half = (dim + 1) // 2
    inv_freq = 1.0 / (10000.0 ** (jnp.arange(0, dim, 2, dtype=jnp.float32) / dim))
    return inv_freq.reshape(1, half)


def _make_kernel(G, half, out_dim):
    """Kernel over a (tile_rows, G) block of positions -> (tile_rows, G*out_dim) output."""

    def kernel(pos_ref, inv_ref, out_ref):
        inv = inv_ref[...]                                   # (1, half) f32
        # Static unroll over the G positions packed into each lane-dense row.
        for g in range(G):
            t = pos_ref[:, g:g + 1].astype(jnp.float32)      # (tile, 1)
            s = t * inv                                       # (tile, half) via broadcast
            base = g * out_dim
            out_ref[:, base:base + half] = jnp.sin(s)         # slice stores, no concat
            out_ref[:, base + half:base + out_dim] = jnp.cos(s)

    return kernel


def fixed_absolute_positional_embedding(position_ids, dim, tile=512):
    """Pallas equivalent of FixedAbsolutePositionalEmbedding.forward."""
    half = (dim + 1) // 2          # len(arange(0, dim, 2))
    out_dim = 2 * half             # == dim for even dim (dim+1 for odd, as in torch)

    inv_freq = _make_inv_freq(dim)

    orig_shape = position_ids.shape
    flat = position_ids.reshape(-1).astype(jnp.int32)
    n = flat.shape[0]

    # Lane-dense packing factor: G positions per 128-lane output row.
    if out_dim <= 128 and 128 % out_dim == 0 and n % (128 // out_dim) == 0:
        G = 128 // out_dim
    else:
        G = 1                      # fallback: correct, but stores are lane-masked
    W = G * out_dim
    n_rows = n // G
    pos2d = flat.reshape(n_rows, G)

    # Row tile: large by default (512 packed rows ≈ 512*G positions per step);
    # clamp for small inputs so we neither waste compute nor create partial blocks.
    if n_rows <= tile:
        tile_rows = n_rows                              # single full-extent block
    else:
        tile_rows = max(8, (min(tile, n_rows) // 8) * 8)  # keep sublane (8) alignment
    grid = (pl.cdiv(n_rows, tile_rows),)

    out = pl.pallas_call(
        _make_kernel(G, half, out_dim),
        out_shape=jax.ShapeDtypeStruct((n_rows, W), jnp.float32),
        grid=grid,
        in_specs=[
            pl.BlockSpec((tile_rows, G), lambda i: (i, 0)),   # packed position ids
            pl.BlockSpec((1, half), lambda i: (0, 0)),        # inv_freq, fetched once
        ],
        out_specs=pl.BlockSpec((tile_rows, W), lambda i: (i, 0)),
        compiler_params=pltpu.CompilerParams(
            dimension_semantics=("parallel",),                # lets v7x shard over 2 TCs
        ),
        cost_estimate=pl.CostEstimate(
            flops=10 * n * out_dim,
            transcendentals=n * out_dim,
            bytes_accessed=4 * n * (1 + out_dim),
        ),
    )(pos2d, inv_freq)

    # (n_rows, G*out_dim) is bitwise identical to (n, out_dim) row-major: free reshape,
    # no epilogue copy.
    return out.reshape(*orig_shape, out_dim)


def _reference(position_ids, dim):
    """Plain-JAX replica of the torch module (table build + gather)."""
    inv_freq = _make_inv_freq(dim)                                  # (1, half)
    t = jnp.arange(MAX_POSITIONS, dtype=jnp.float32)
    sinusoid = t[:, None] * inv_freq                                # (16384, half)
    emb = jnp.concatenate([jnp.sin(sinusoid), jnp.cos(sinusoid)], axis=-1)
    return emb[position_ids.astype(jnp.int32)]


if __name__ == "__main__":
    dim = 32
    key = jax.random.PRNGKey(0)
    position_ids = jax.random.randint(key, (2, 8), 0, MAX_POSITIONS, dtype=jnp.int32)

    out = fixed_absolute_positional_embedding(position_ids, dim)
    out = jax.block_until_ready(out)
    ref = _reference(position_ids, dim)

    assert out.shape == (2, 8, dim), out.shape
    assert out.dtype == jnp.float32
    # f32 sin/cos at arguments up to ~16383 carry range-reduction error ~1e-4;
    # arguments are bit-identical to the reference so this stays tight.
    assert jnp.allclose(out, ref, atol=1e-4, rtol=1e-4), float(jnp.max(jnp.abs(out - ref)))

    # Ragged element count (15 % 4 != 0) exercises the unpacked G=1 fallback,
    # still with no pad / slice epilogue.
    pos2 = jax.random.randint(jax.random.PRNGKey(1), (3, 5), 0, MAX_POSITIONS,
                              dtype=jnp.int32)
    out2 = jax.block_until_ready(fixed_absolute_positional_embedding(pos2, dim))
    ref2 = _reference(pos2, dim)
    assert out2.shape == (3, 5, dim), out2.shape
    assert jnp.allclose(out2, ref2, atol=1e-4, rtol=1e-4)

    print("KERNEL_OK")
</pallas_src>

<mosaic_0001>
module attributes {stable_mosaic.version = 11 : i64} {
  func.func @kernel(%arg0: i32, %arg1: memref<4x4xi32, #tpu.memory_space<vmem>>, %arg2: memref<1x16xf32, #tpu.memory_space<vmem>>, %arg3: memref<4x128xf32, #tpu.memory_space<vmem>>) attributes {dimension_semantics = [#tpu.dimension_semantics<parallel>], iteration_bounds = array<i64: 1>, scalar_prefetch = 0 : i64, scratch_operands = 0 : i64, tpu.core_type = #tpu.core_type<tc>, window_params = [{transform_indices = @transform_0, window_bounds = array<i64: 4, 4>}, {pipeline_mode = #tpu.pipeline_mode<synchronous>, transform_indices = @transform_1, window_bounds = array<i64: 1, 16>}, {transform_indices = @transform_2, window_bounds = array<i64: 4, 128>}]} {
    %c0 = arith.constant 0 : index
    %c0_0 = arith.constant 0 : index
    %0 = vector.load %arg2[%c0, %c0_0] : memref<1x16xf32, #tpu.memory_space<vmem>>, vector<1x16xf32>
    %c0_1 = arith.constant 0 : index
    %c0_2 = arith.constant 0 : index
    %1 = vector.load %arg1[%c0_1, %c0_2] : memref<4x4xi32, #tpu.memory_space<vmem>>, vector<4x1xi32>
    %2 = arith.sitofp %1 : vector<4x1xi32> to vector<4x1xf32>
    %3 = vector.broadcast %2 : vector<4x1xf32> to vector<4x16xf32>
    %4 = vector.broadcast %0 : vector<1x16xf32> to vector<4x16xf32>
    %5 = arith.mulf %3, %4 : vector<4x16xf32>
    %6 = math.sin %5 : vector<4x16xf32>
    %c0_3 = arith.constant 0 : index
    %c0_4 = arith.constant 0 : index
    %7 = vector.load %arg3[%c0_3, %c0_4] : memref<4x128xf32, #tpu.memory_space<vmem>>, vector<4x16xf32>
    tpu.vector_store %arg3[%c0_3, %c0_4], %6 {strides = array<i32>} : memref<4x128xf32, #tpu.memory_space<vmem>>, vector<4x16xf32>,
    %8 = math.cos %5 : vector<4x16xf32>
    %c0_5 = arith.constant 0 : index
    %c16 = arith.constant 16 : index
    %9 = vector.load %arg3[%c0_5, %c16] : memref<4x128xf32, #tpu.memory_space<vmem>>, vector<4x16xf32>
    tpu.vector_store %arg3[%c0_5, %c16], %8 {strides = array<i32>} : memref<4x128xf32, #tpu.memory_space<vmem>>, vector<4x16xf32>,
    %c0_6 = arith.constant 0 : index
    %c1 = arith.constant 1 : index
    %10 = vector.load %arg1[%c0_6, %c1] : memref<4x4xi32, #tpu.memory_space<vmem>>, vector<4x1xi32>
    %11 = arith.sitofp %10 : vector<4x1xi32> to vector<4x1xf32>
    %12 = vector.broadcast %11 : vector<4x1xf32> to vector<4x16xf32>
    %13 = vector.broadcast %0 : vector<1x16xf32> to vector<4x16xf32>
    %14 = arith.mulf %12, %13 : vector<4x16xf32>
    %15 = math.sin %14 : vector<4x16xf32>
    %c0_7 = arith.constant 0 : index
    %c32 = arith.constant 32 : index
    %16 = vector.load %arg3[%c0_7, %c32] : memref<4x128xf32, #tpu.memory_space<vmem>>, vector<4x16xf32>
    tpu.vector_store %arg3[%c0_7, %c32], %15 {strides = array<i32>} : memref<4x128xf32, #tpu.memory_space<vmem>>, vector<4x16xf32>,
    %17 = math.cos %14 : vector<4x16xf32>
    %c0_8 = arith.constant 0 : index
    %c48 = arith.constant 48 : index
    %18 = vector.load %arg3[%c0_8, %c48] : memref<4x128xf32, #tpu.memory_space<vmem>>, vector<4x16xf32>
    tpu.vector_store %arg3[%c0_8, %c48], %17 {strides = array<i32>} : memref<4x128xf32, #tpu.memory_space<vmem>>, vector<4x16xf32>,
    %c0_9 = arith.constant 0 : index
    %c2 = arith.constant 2 : index
    %19 = vector.load %arg1[%c0_9, %c2] : memref<4x4xi32, #tpu.memory_space<vmem>>, vector<4x1xi32>
    %20 = arith.sitofp %19 : vector<4x1xi32> to vector<4x1xf32>
    %21 = vector.broadcast %20 : vector<4x1xf32> to vector<4x16xf32>
    %22 = vector.broadcast %0 : vector<1x16xf32> to vector<4x16xf32>
    %23 = arith.mulf %21, %22 : vector<4x16xf32>
    %24 = math.sin %23 : vector<4x16xf32>
    %c0_10 = arith.constant 0 : index
    %c64 = arith.constant 64 : index
    %25 = vector.load %arg3[%c0_10, %c64] : memref<4x128xf32, #tpu.memory_space<vmem>>, vector<4x16xf32>
    tpu.vector_store %arg3[%c0_10, %c64], %24 {strides = array<i32>} : memref<4x128xf32, #tpu.memory_space<vmem>>, vector<4x16xf32>,
    %26 = math.cos %23 : vector<4x16xf32>
    %c0_11 = arith.constant 0 : index
    %c80 = arith.constant 80 : index
    %27 = vector.load %arg3[%c0_11, %c80] : memref<4x128xf32, #tpu.memory_space<vmem>>, vector<4x16xf32>
    tpu.vector_store %arg3[%c0_11, %c80], %26 {strides = array<i32>} : memref<4x128xf32, #tpu.memory_space<vmem>>, vector<4x16xf32>,
    %c0_12 = arith.constant 0 : index
    %c3 = arith.constant 3 : index
    %28 = vector.load %arg1[%c0_12, %c3] : memref<4x4xi32, #tpu.memory_space<vmem>>, vector<4x1xi32>
    %29 = arith.sitofp %28 : vector<4x1xi32> to vector<4x1xf32>
    %30 = vector.broadcast %29 : vector<4x1xf32> to vector<4x16xf32>
    %31 = vector.broadcast %0 : vector<1x16xf32> to vector<4x16xf32>
    %32 = arith.mulf %30, %31 : vector<4x16xf32>
    %33 = math.sin %32 : vector<4x16xf32>
    %c0_13 = arith.constant 0 : index
    %c96 = arith.constant 96 : index
    %34 = vector.load %arg3[%c0_13, %c96] : memref<4x128xf32, #tpu.memory_space<vmem>>, vector<4x16xf32>
    tpu.vector_store %arg3[%c0_13, %c96], %33 {strides = array<i32>} : memref<4x128xf32, #tpu.memory_space<vmem>>, vector<4x16xf32>,
    %35 = math.cos %32 : vector<4x16xf32>
    %c0_14 = arith.constant 0 : index
    %c112 = arith.constant 112 : index
    %36 = vector.load %arg3[%c0_14, %c112] : memref<4x128xf32, #tpu.memory_space<vmem>>, vector<4x16xf32>
    tpu.vector_store %arg3[%c0_14, %c112], %35 {strides = array<i32>} : memref<4x128xf32, #tpu.memory_space<vmem>>, vector<4x16xf32>,
    return
  }
  func.func @transform_0(%arg0: i32) -> (i32, i32) {
    %c0_i32 = arith.constant 0 : i32
    %c0_i32_0 = arith.constant 0 : i32
    return %arg0, %c0_i32 : i32, i32
  }
  func.func @transform_1(%arg0: i32) -> (i32, i32) {
    %c0_i32 = arith.constant 0 : i32
    %c0_i32_0 = arith.constant 0 : i32
    %c0_i32_1 = arith.constant 0 : i32
    return %c0_i32, %c0_i32_0 : i32, i32
  }
  func.func @transform_2(%arg0: i32) -> (i32, i32) {
    %c0_i32 = arith.constant 0 : i32
    %c0_i32_0 = arith.constant 0 : i32
    return %arg0, %c0_i32 : i32, i32
  }
}

</mosaic_0001>

<llo_original>
// kernel: tpu_custom_call.1
$region0: #{tpu_custom_call.1}
  #allocation0 [shape = 'u32[]', space=smem, size = 0x4, offset = 0x4, fixed_abs, tag = 'smem constant byte address 0x4 - core index']
  #allocation1 [shape = 'u32[144,128]{1,0:T(1,128)}', space=vmem, size = 0x12000, scoped, tag = 'internal scratch']
  %s0 = inlined_call_operand.hbm [shape: s32[4,4], index: 0, kind: input, shape index: {}]
  %s1 = inlined_call_operand.vmem [shape: f32[1,16], index: 1, kind: input, shape index: {}]
  %s2 = inlined_call_operand.hbm [shape: f32[4,128], index: 2, kind: output, shape index: {}]
  %s3 = sld [smem:[#allocation0]]
  $region22: #{tpu_custom_call.1} parent=0
    _
  %s5 = ssub.s32 1, %s3
  %s6 = scalar_select 0, %s5, %s3
  $region1: #{tpu_custom_call.1} parent=0
    #allocation2 [shape = 'u8[2048]{0}', space=vmem, size = 0x800, scoped, tag = 'input window, operand 0, single buffered']
    #allocation3 [shape = 's32[1]{0}', space=sflag, size = 0x4, scoped, tag = 'scoped memory for tpu_custom_call.1']
    #allocation4 [shape = 's32[1]{0}', space=sflag, size = 0x4, scoped, tag = 'scoped memory for tpu_custom_call.1']
    #allocation5 [shape = 'u8[2048]{0}', space=vmem, size = 0x800, scoped, tag = 'output window, operand 0, single buffered']
    %7 = vsyncpa [#allocation3], 0
    %8 = vsyncpa [#allocation4], 0
    // Predicated region
    $region2: #{tpu_custom_call.1} parent=1 // pred_check
      _
    $region3: #{tpu_custom_call.1} parent=1 // pred_check_branch
      %10 = sbr.rel (0) target = $region5
    $region4: #{tpu_custom_call.1} parent=1 // pred_region
      %s12 = ssub.s32 64, 64
      %13 = vsyncadd [#allocation3], %s12
      %s15 = sshll.u32 [#allocation2], 4
      %s16 = int_to_ptr.vmem [resolvable:$true] %s15
      %18 = dma.hbm_to_vmem [thread:$0]  %s0, 64, %s16, [#allocation3]
    $region5: #{tpu_custom_call.1} parent=1 // pred_fallthru
      _
    // Predicated region
    $region6: #{tpu_custom_call.1} parent=1 // pred_check
      _
    $region7: #{tpu_custom_call.1} parent=1 // pred_check_branch
      %20 = sbr.rel (0) target = $region9
    $region8: #{tpu_custom_call.1} parent=1 // pred_region
      _
    $region9: #{tpu_custom_call.1} parent=1 // pred_fallthru
      _
    // Predicated region
    $region10: #{tpu_custom_call.1} parent=1 // pred_check
      _
    $region11: #{tpu_custom_call.1} parent=1 // pred_check_branch
      %22 = sbr.rel (0) target = $region13
    $region12: #{tpu_custom_call.1} parent=1 // pred_region
      %23 = dma.done [#allocation3], 64
    $region13: #{tpu_custom_call.1} parent=1 // pred_fallthru
      _
    %v24 = vld [vmem:[%s1] sm:$0x1]
    %v25 = vld [vmem:[#allocation2] sm:$0xf]
    %v26 = vcvt.s32.f32 %v25
    %28 = vset.pattern.permute.xlu0 0
    %29 = vperm.xlu0 %28, %v26
    %v30 = vpop.permute.xlu0 %29
    %v33 = vlaneseq
    %v34 = vshrl.u32 %v33, 7
    %v35 = vsub.s32 0, %v34
    %v36 = vrot.slane %v24, %v35
    %v38 = vmul.f32 %v30, %v36
    %v39 = vand.u32 2147483647, %v38
    %vm40 = vcmp.le.f32.partialorder %v39, 0.7853982
    %vm41 = vcmp.lt.s32.totalorder %v38, 0
    %v42 = vand.u32 %v38, 2139095040
    %v43 = vshrl.u32 %v42, 23
    %v44 = vsub.s32 %v43, 127
    %v45 = vand.u32 2147483647, %v38
    %v46 = vand.u32 %v45, 8388607
    %v47 = vor.u32 %v46, 8388608
    %v48 = vsub.s32 0, %v47
    %v49 = vadd.s32 %v44, 1
    %vm50 = vcmp.gt.s32.totalorder %v49, 0
    %v51 = vsel %vm50, %v49, 0
    %v52 = vshrl.u32 %v51, 5
    %v53 = vand.u32 %v51, 31
    %v54 = vsub.s32 32, %v53
    %v55 = vshrl.u32 683565275, %v54
    %v56 = vshll.u32 683565275, %v53
    %v57 = vshrl.u32 2475754826, %v54
    %v58 = vor.u32 %v56, %v57
    %v59 = vshll.u32 2475754826, %v53
    %v60 = vshrl.u32 2131351028, %v54
    %v61 = vor.u32 %v59, %v60
    %v62 = vshll.u32 2131351028, %v53
    %v63 = vshrl.u32 2102212464, %v54
    %v64 = vor.u32 %v62, %v63
    %v65 = vshll.u32 2102212464, %v53
    %v66 = vshrl.u32 920167782, %v54
    %v67 = vor.u32 %v65, %v66
    %v68 = vshll.u32 920167782, %v53
    %v69 = vshrl.u32 1326507024, %v54
    %v70 = vor.u32 %v68, %v69
    %vm71 = vcmp.lt.s32.totalorder %v52, 1
    %vm72 = vcmp.lt.s32.totalorder %v52, 2
    %vm73 = vcmp.lt.s32.totalorder %v52, 3
    %vm74 = vcmp.lt.s32.totalorder %v52, 4
    %v75 = vsel %vm71, %v55, %v58
    %v76 = vsel %vm74, %v64, 2102212464
    %v77 = vsel %vm73, %v61, %v76
    %v78 = vsel %vm72, %v75, %v77
    %v79 = vsel %vm71, %v58, %v61
    %v80 = vsel %vm74, %v67, 920167782
    %v81 = vsel %vm73, %v64, %v80
    %v82 = vsel %vm72, %v79, %v81
    %v83 = vsel %vm71, %v61, %v64
    %v84 = vsel %vm74, %v70, 1326507024
    %v85 = vsel %vm73, %v67, %v84
    %v86 = vsel %vm72, %v83, %v85
    %v87 = vshll.u32 %v47, 8
    %v88 = vmul.u32.u64.compose %v87, %v86
    %v89 = vextract.low.u32 %v88
    %v90 = vextract.high.u32 %v88
    %v91 = vmul.u32.u64.compose %v87, %v82
    %v92 = vextract.low.u32 %v91
    %v93 = vextract.high.u32 %v91
    %v94 = vmul.u32 %v87, %v78
    %v95 = vadd.s32 %v90, %v92
    %vm96 = vc.u32 %v90, %v92
    %v97 = vadd.s32 %v93, 1
    %v98 = vsel %vm96, %v97, %v93
    %v99 = vadd.s32 %v94, %v98
    %v100 = vadd.s32 %v99, 536870912
    %v101 = vshrl.u32 %v100, 30
    %v102 = vshll.u32 %v101, 30
    %v103 = vsub.s32 %v99, %v102
    %vm104 = vcmp.lt.s32.totalorder %v103, 0
    %v105 = vsub.s32 0, %v103
    %v106 = vsel %vm104, %v105, %v103
    %v107 = vclz %v106
    %v108 = vsub.s32 %v107, 2
    %vm109 = vcmp.gt.s32.totalorder 0, %v108
    %v110 = vsel %vm109, 0, %v108
    %v111 = vsub.s32 32, %v110
    %v112 = vshll.u32 %v103, %v110
    %v113 = vshrl.u32 %v95, %v111
    %v114 = vor.u32 %v112, %v113
    %v115 = vsub.s32 4294967266, %v110
    %v116 = vadd.s32 %v115, 127
    %v117 = vshll.u32 %v116, 23
    %v118 = vor.u32 4788187, %v117
    %v119 = vand.u32 2147483647, %v118
    %v121 = vcvt.s32.f32 %v114
    %v122 = vmul.f32 %v121, %v119
    %v123 = vxor.u32 %v122, 2147483648
    %v124 = vsel %vm41, %v123, %v122
    %v125 = vsub.s32 4, %v101
    %v126 = vsel %vm41, %v125, %v101
    %v127 = vsel %vm40, %v38, %v124
    %v128 = vsel %vm40, 0, %v126
    %v129 = vcosq.f32.pop %v127
    %v130 = vsinq.f32.pop %v127
    %vm131 = vweird.f32 %v38
    %v132 = vadd.s32 %v128, 3
    %v133 = vand.u32 %v132, 3
    %vm134 = vcmp.lt.s32.totalorder %v133, 2
    %vm135 = vcmp.eq.s32.totalorder %v133, 0
    %v136 = vxor.u32 %v130, 2147483648
    %v137 = vsel %vm135, %v129, %v136
    %vm138 = vcmp.eq.s32.totalorder %v133, 2
    %v139 = vxor.u32 %v129, 2147483648
    %v140 = vsel %vm138, %v139, %v130
    %v141 = vsel %vm134, %v137, %v140
    %v142 = vsel %vm131, nan, %v141
    %vm143 = vcmask 125952
    %144 = vst.msk [vmem:[#allocation5] sm:$0xf] %vm143, %v142
    %v145 = vand.u32 2147483647, %v38
    %vm146 = vcmp.le.f32.partialorder %v145, 0.7853982
    %vm147 = vcmp.lt.s32.totalorder %v38, 0
    %v148 = vand.u32 %v38, 2139095040
    %v149 = vshrl.u32 %v148, 23
    %v150 = vsub.s32 %v149, 127
    %v151 = vand.u32 2147483647, %v38
    %v152 = vand.u32 %v151, 8388607
    %v153 = vor.u32 %v152, 8388608
    %v154 = vsub.s32 0, %v153
    %v155 = vadd.s32 %v150, 1
    %vm156 = vcmp.gt.s32.totalorder %v155, 0
    %v157 = vsel %vm156, %v155, 0
    %v158 = vshrl.u32 %v157, 5
    %v159 = vand.u32 %v157, 31
    %v160 = vsub.s32 32, %v159
    %v161 = vshrl.u32 683565275, %v160
    %v162 = vshll.u32 683565275, %v159
    %v163 = vshrl.u32 2475754826, %v160
    %v164 = vor.u32 %v162, %v163
    %v165 = vshll.u32 2475754826, %v159
    %v166 = vshrl.u32 2131351028, %v160
    %v167 = vor.u32 %v165, %v166
    %v168 = vshll.u32 2131351028, %v159
    %v169 = vshrl.u32 2102212464, %v160
    %v170 = vor.u32 %v168, %v169
    %v171 = vshll.u32 2102212464, %v159
    %v172 = vshrl.u32 920167782, %v160
    %v173 = vor.u32 %v171, %v172
    %v174 = vshll.u32 920167782, %v159
    %v175 = vshrl.u32 1326507024, %v160
    %v176 = vor.u32 %v174, %v175
    %vm177 = vcmp.lt.s32.totalorder %v158, 1
    %vm178 = vcmp.lt.s32.totalorder %v158, 2
    %vm179 = vcmp.lt.s32.totalorder %v158, 3
    %vm180 = vcmp.lt.s32.totalorder %v158, 4
    %v181 = vsel %vm177, %v161, %v164
    %v182 = vsel %vm180, %v170, 2102212464
    %v183 = vsel %vm179, %v167, %v182
    %v184 = vsel %vm178, %v181, %v183
    %v185 = vsel %vm177, %v164, %v167
    %v186 = vsel %vm180, %v173, 920167782
    %v187 = vsel %vm179, %v170, %v186
    %v188 = vsel %vm178, %v185, %v187
    %v189 = vsel %vm177, %v167, %v170
    %v190 = vsel %vm180, %v176, 1326507024
    %v191 = vsel %vm179, %v173, %v190
    %v192 = vsel %vm178, %v189, %v191
    %v193 = vshll.u32 %v153, 8
    %v194 = vmul.u32.u64.compose %v193, %v192
    %v195 = vextract.low.u32 %v194
    %v196 = vextract.high.u32 %v194
    %v197 = vmul.u32.u64.compose %v193, %v188
    %v198 = vextract.low.u32 %v197
    %v199 = vextract.high.u32 %v197
    %v200 = vmul.u32 %v193, %v184
    %v201 = vadd.s32 %v196, %v198
    %vm202 = vc.u32 %v196, %v198
    %v203 = vadd.s32 %v199, 1
    %v204 = vsel %vm202, %v203, %v199
    %v205 = vadd.s32 %v200, %v204
    %v206 = vadd.s32 %v205, 536870912
    %v207 = vshrl.u32 %v206, 30
    %v208 = vshll.u32 %v207, 30
    %v209 = vsub.s32 %v205, %v208
    %vm210 = vcmp.lt.s32.totalorder %v209, 0
    %v211 = vsub.s32 0, %v209
    %v212 = vsel %vm210, %v211, %v209
    %v213 = vclz %v212
    %v214 = vsub.s32 %v213, 2
    %vm215 = vcmp.gt.s32.totalorder 0, %v214
    %v216 = vsel %vm215, 0, %v214
    %v217 = vsub.s32 32, %v216
    %v218 = vshll.u32 %v209, %v216
    %v219 = vshrl.u32 %v201, %v217
    %v220 = vor.u32 %v218, %v219
    %v221 = vsub.s32 4294967266, %v216
    %v222 = vadd.s32 %v221, 127
    %v223 = vshll.u32 %v222, 23
    %v224 = vor.u32 4788187, %v223
    %v225 = vand.u32 2147483647, %v224
    %v227 = vcvt.s32.f32 %v220
    %v228 = vmul.f32 %v227, %v225
    %v229 = vxor.u32 %v228, 2147483648
    %v230 = vsel %vm147, %v229, %v228
    %v231 = vsub.s32 4, %v207
    %v232 = vsel %vm147, %v231, %v207
    %v233 = vsel %vm146, %v38, %v230
    %v234 = vsel %vm146, 0, %v232
    %v235 = vcosq.f32.pop %v233
    %v236 = vsinq.f32.pop %v233
    %vm237 = vweird.f32 %v38
    %v238 = vand.u32 %v234, 3
    %vm239 = vcmp.lt.s32.totalorder %v238, 2
    %vm240 = vcmp.eq.s32.totalorder %v238, 0
    %v241 = vxor.u32 %v236, 2147483648
    %v242 = vsel %vm240, %v235, %v241
    %vm243 = vcmp.eq.s32.totalorder %v238, 2
    %v244 = vxor.u32 %v235, 2147483648
    %v245 = vsel %vm243, %v244, %v236
    %v246 = vsel %vm239, %v242, %v245
    %v247 = vsel %vm237, nan, %v246
    %249 = vrot.lane.b32.xlu0 %v247, 16
    %v250 = vpop.permute.xlu0 %249
    %vm252 = vcmask 257152
    %253 = vst.msk [vmem:[#allocation5] sm:$0xf] %vm252, %v250
    %v254 = vld [vmem:[#allocation2] sm:$0xf]
    %v255 = vcvt.s32.f32 %v254
    %257 = vset.pattern.permute.xlu0 1
    %258 = vperm.xlu0 %257, %v255
    %v259 = vpop.permute.xlu0 %258
    %v261 = vmul.f32 %v259, %v36
    %v262 = vand.u32 2147483647, %v261
    %vm263 = vcmp.le.f32.partialorder %v262, 0.7853982
    %vm264 = vcmp.lt.s32.totalorder %v261, 0
    %v265 = vand.u32 %v261, 2139095040
    %v266 = vshrl.u32 %v265, 23
    %v267 = vsub.s32 %v266, 127
    %v268 = vand.u32 2147483647, %v261
    %v269 = vand.u32 %v268, 8388607
    %v270 = vor.u32 %v269, 8388608
    %v271 = vsub.s32 0, %v270
    %v272 = vadd.s32 %v267, 1
    %vm273 = vcmp.gt.s32.totalorder %v272, 0
    %v274 = vsel %vm273, %v272, 0
    %v275 = vshrl.u32 %v274, 5
    %v276 = vand.u32 %v274, 31
    %v277 = vsub.s32 32, %v276
    %v278 = vshrl.u32 683565275, %v277
    %v279 = vshll.u32 683565275, %v276
    %v280 = vshrl.u32 2475754826, %v277
    %v281 = vor.u32 %v279, %v280
    %v282 = vshll.u32 2475754826, %v276
    %v283 = vshrl.u32 2131351028, %v277
    %v284 = vor.u32 %v282, %v283
    %v285 = vshll.u32 2131351028, %v276
    %v286 = vshrl.u32 2102212464, %v277
    %v287 = vor.u32 %v285, %v286
    %v288 = vshll.u32 2102212464, %v276
    %v289 = vshrl.u32 920167782, %v277
    %v290 = vor.u32 %v288, %v289
    %v291 = vshll.u32 920167782, %v276
    %v292 = vshrl.u32 1326507024, %v277
    %v293 = vor.u32 %v291, %v292
    %vm294 = vcmp.lt.s32.totalorder %v275, 1
    %vm295 = vcmp.lt.s32.totalorder %v275, 2
    %vm296 = vcmp.lt.s32.totalorder %v275, 3
    %vm297 = vcmp.lt.s32.totalorder %v275, 4
    %v298 = vsel %vm294, %v278, %v281
    %v299 = vsel %vm297, %v287, 2102212464
    %v300 = vsel %vm296, %v284, %v299
    %v301 = vsel %vm295, %v298, %v300
    %v302 = vsel %vm294, %v281, %v284
    %v303 = vsel %vm297, %v290, 920167782
    %v304 = vsel %vm296, %v287, %v303
    %v305 = vsel %vm295, %v302, %v304
    %v306 = vsel %vm294, %v284, %v287
    %v307 = vsel %vm297, %v293, 1326507024
    %v308 = vsel %vm296, %v290, %v307
    %v309 = vsel %vm295, %v306, %v308
    %v310 = vshll.u32 %v270, 8
    %v311 = vmul.u32.u64.compose %v310, %v309
    %v312 = vextract.low.u32 %v311
    %v313 = vextract.high.u32 %v311
    %v314 = vmul.u32.u64.compose %v310, %v305
    %v315 = vextract.low.u32 %v314
    %v316 = vextract.high.u32 %v314
    %v317 = vmul.u32 %v310, %v301
    %v318 = vadd.s32 %v313, %v315
    %vm319 = vc.u32 %v313, %v315
    %v320 = vadd.s32 %v316, 1
    %v321 = vsel %vm319, %v320, %v316
    %v322 = vadd.s32 %v317, %v321
    %v323 = vadd.s32 %v322, 536870912
    %v324 = vshrl.u32 %v323, 30
    %v325 = vshll.u32 %v324, 30
    %v326 = vsub.s32 %v322, %v325
    %vm327 = vcmp.lt.s32.totalorder %v326, 0
    %v328 = vsub.s32 0, %v326
    %v329 = vsel %vm327, %v328, %v326
    %v330 = vclz %v329
    %v331 = vsub.s32 %v330, 2
    %vm332 = vcmp.gt.s32.totalorder 0, %v331
    %v333 = vsel %vm332, 0, %v331
    %v334 = vsub.s32 32, %v333
    %v335 = vshll.u32 %v326, %v333
    %v336 = vshrl.u32 %v318, %v334
    %v337 = vor.u32 %v335, %v336
    %v338 = vsub.s32 4294967266, %v333
    %v339 = vadd.s32 %v338, 127
    %v340 = vshll.u32 %v339, 23
    %v341 = vor.u32 4788187, %v340
    %v342 = vand.u32 2147483647, %v341
    %v344 = vcvt.s32.f32 %v337
    %v345 = vmul.f32 %v344, %v342
    %v346 = vxor.u32 %v345, 2147483648
    %v347 = vsel %vm264, %v346, %v345
    %v348 = vsub.s32 4, %v324
    %v349 = vsel %vm264, %v348, %v324
    %v350 = vsel %vm263, %v261, %v347
    %v351 = vsel %vm263, 0, %v349
    %v352 = vcosq.f32.pop %v350
    %v353 = vsinq.f32.pop %v350
    %vm354 = vweird.f32 %v261
    %v355 = vadd.s32 %v351, 3
    %v356 = vand.u32 %v355, 3
    %vm357 = vcmp.lt.s32.totalorder %v356, 2
    %vm358 = vcmp.eq.s32.totalorder %v356, 0
    %v359 = vxor.u32 %v353, 2147483648
    %v360 = vsel %vm358, %v352, %v359
    %vm361 = vcmp.eq.s32.totalorder %v356, 2
    %v362 = vxor.u32 %v352, 2147483648
    %v363 = vsel %vm361, %v362, %v353
    %v364 = vsel %vm357, %v360, %v363
    %v365 = vsel %vm354, nan, %v364
    %367 = vrot.lane.b32.xlu0 %v365, 32
    %v368 = vpop.permute.xlu0 %367
    %vm370 = vcmask 388352
    %371 = vst.msk [vmem:[#allocation5] sm:$0xf] %vm370, %v368
    %v372 = vand.u32 2147483647, %v261
    %vm373 = vcmp.le.f32.partialorder %v372, 0.7853982
    %vm374 = vcmp.lt.s32.totalorder %v261, 0
    %v375 = vand.u32 %v261, 2139095040
    %v376 = vshrl.u32 %v375, 23
    %v377 = vsub.s32 %v376, 127
    %v378 = vand.u32 2147483647, %v261
    %v379 = vand.u32 %v378, 8388607
    %v380 = vor.u32 %v379, 8388608
    %v381 = vsub.s32 0, %v380
    %v382 = vadd.s32 %v377, 1
    %vm383 = vcmp.gt.s32.totalorder %v382, 0
    %v384 = vsel %vm383, %v382, 0
    %v385 = vshrl.u32 %v384, 5
    %v386 = vand.u32 %v384, 31
    %v387 = vsub.s32 32, %v386
    %v388 = vshrl.u32 683565275, %v387
    %v389 = vshll.u32 683565275, %v386
    %v390 = vshrl.u32 2475754826, %v387
    %v391 = vor.u32 %v389, %v390
    %v392 = vshll.u32 2475754826, %v386
    %v393 = vshrl.u32 2131351028, %v387
    %v394 = vor.u32 %v392, %v393
    %v395 = vshll.u32 2131351028, %v386
    %v396 = vshrl.u32 2102212464, %v387
    %v397 = vor.u32 %v395, %v396
    %v398 = vshll.u32 2102212464, %v386
    %v399 = vshrl.u32 920167782, %v387
    %v400 = vor.u32 %v398, %v399
    %v401 = vshll.u32 920167782, %v386
    %v402 = vshrl.u32 1326507024, %v387
    %v403 = vor.u32 %v401, %v402
    %vm404 = vcmp.lt.s32.totalorder %v385, 1
    %vm405 = vcmp.lt.s32.totalorder %v385, 2
    %vm406 = vcmp.lt.s32.totalorder %v385, 3
    %vm407 = vcmp.lt.s32.totalorder %v385, 4
    %v408 = vsel %vm404, %v388, %v391
    %v409 = vsel %vm407, %v397, 2102212464
    %v410 = vsel %vm406, %v394, %v409
    %v411 = vsel %vm405, %v408, %v410
    %v412 = vsel %vm404, %v391, %v394
    %v413 = vsel %vm407, %v400, 920167782
    %v414 = vsel %vm406, %v397, %v413
    %v415 = vsel %vm405, %v412, %v414
    %v416 = vsel %vm404, %v394, %v397
    %v417 = vsel %vm407, %v403, 1326507024
    %v418 = vsel %vm406, %v400, %v417
    %v419 = vsel %vm405, %v416, %v418
    %v420 = vshll.u32 %v380, 8
    %v421 = vmul.u32.u64.compose %v420, %v419
    %v422 = vextract.low.u32 %v421
    %v423 = vextract.high.u32 %v421
    %v424 = vmul.u32.u64.compose %v420, %v415
    %v425 = vextract.low.u32 %v424
    %v426 = vextract.high.u32 %v424
    %v427 = vmul.u32 %v420, %v411
    %v428 = vadd.s32 %v423, %v425
    %vm429 = vc.u32 %v423, %v425
    %v430 = vadd.s32 %v426, 1
    %v431 = vsel %vm429, %v430, %v426
    %v432 = vadd.s32 %v427, %v431
    %v433 = vadd.s32 %v432, 536870912
    %v434 = vshrl.u32 %v433, 30
    %v435 = vshll.u32 %v434, 30
    %v436 = vsub.s32 %v432, %v435
    %vm437 = vcmp.lt.s32.totalorder %v436, 0
    %v438 = vsub.s32 0, %v436
    %v439 = vsel %vm437, %v438, %v436
    %v440 = vclz %v439
    %v441 = vsub.s32 %v440, 2
    %vm442 = vcmp.gt.s32.totalorder 0, %v441
    %v443 = vsel %vm442, 0, %v441
    %v444 = vsub.s32 32, %v443
    %v445 = vshll.u32 %v436, %v443
    %v446 = vshrl.u32 %v428, %v444
    %v447 = vor.u32 %v445, %v446
    %v448 = vsub.s32 4294967266, %v443
    %v449 = vadd.s32 %v448, 127
    %v450 = vshll.u32 %v449, 23
    %v451 = vor.u32 4788187, %v450
    %v452 = vand.u32 2147483647, %v451
    %v454 = vcvt.s32.f32 %v447
    %v455 = vmul.f32 %v454, %v452
    %v456 = vxor.u32 %v455, 2147483648
    %v457 = vsel %vm374, %v456, %v455
    %v458 = vsub.s32 4, %v434
    %v459 = vsel %vm374, %v458, %v434
    %v460 = vsel %vm373, %v261, %v457
    %v461 = vsel %vm373, 0, %v459
    %v462 = vcosq.f32.pop %v460
    %v463 = vsinq.f32.pop %v460
    %vm464 = vweird.f32 %v261
    %v465 = vand.u32 %v461, 3
    %vm466 = vcmp.lt.s32.totalorder %v465, 2
    %vm467 = vcmp.eq.s32.totalorder %v465, 0
    %v468 = vxor.u32 %v463, 2147483648
    %v469 = vsel %vm467, %v462, %v468
    %vm470 = vcmp.eq.s32.totalorder %v465, 2
    %v471 = vxor.u32 %v462, 2147483648
    %v472 = vsel %vm470, %v471, %v463
    %v473 = vsel %vm466, %v469, %v472
    %v474 = vsel %vm464, nan, %v473
    %476 = vrot.lane.b32.xlu0 %v474, 48
    %v477 = vpop.permute.xlu0 %476
    %vm479 = vcmask 519552
    %480 = vst.msk [vmem:[#allocation5] sm:$0xf] %vm479, %v477
    %v481 = vld [vmem:[#allocation2] sm:$0xf]
    %v482 = vcvt.s32.f32 %v481
    %484 = vset.pattern.permute.xlu0 2
    %485 = vperm.xlu0 %484, %v482
    %v486 = vpop.permute.xlu0 %485
    %v488 = vmul.f32 %v486, %v36
    %v489 = vand.u32 2147483647, %v488
    %vm490 = vcmp.le.f32.partialorder %v489, 0.7853982
    %vm491 = vcmp.lt.s32.totalorder %v488, 0
    %v492 = vand.u32 %v488, 2139095040
    %v493 = vshrl.u32 %v492, 23
    %v494 = vsub.s32 %v493, 127
    %v495 = vand.u32 2147483647, %v488
    %v496 = vand.u32 %v495, 8388607
    %v497 = vor.u32 %v496, 8388608
    %v498 = vsub.s32 0, %v497
    %v499 = vadd.s32 %v494, 1
    %vm500 = vcmp.gt.s32.totalorder %v499, 0
    %v501 = vsel %vm500, %v499, 0
    %v502 = vshrl.u32 %v501, 5
    %v503 = vand.u32 %v501, 31
    %v504 = vsub.s32 32, %v503
    %v505 = vshrl.u32 683565275, %v504
    %v506 = vshll.u32 683565275, %v503
    %v507 = vshrl.u32 2475754826, %v504
    %v508 = vor.u32 %v506, %v507
    %v509 = vshll.u32 2475754826, %v503
    %v510 = vshrl.u32 2131351028, %v504
    %v511 = vor.u32 %v509, %v510
    %v512 = vshll.u32 2131351028, %v503
    %v513 = vshrl.u32 2102212464, %v504
    %v514 = vor.u32 %v512, %v513
    %v515 = vshll.u32 2102212464, %v503
    %v516 = vshrl.u32 920167782, %v504
    %v517 = vor.u32 %v515, %v516
    %v518 = vshll.u32 920167782, %v503
    %v519 = vshrl.u32 1326507024, %v504
    %v520 = vor.u32 %v518, %v519
    %vm521 = vcmp.lt.s32.totalorder %v502, 1
    %vm522 = vcmp.lt.s32.totalorder %v502, 2
    %vm523 = vcmp.lt.s32.totalorder %v502, 3
    %vm524 = vcmp.lt.s32.totalorder %v502, 4
    %v525 = vsel %vm521, %v505, %v508
    %v526 = vsel %vm524, %v514, 2102212464
    %v527 = vsel %vm523, %v511, %v526
    %v528 = vsel %vm522, %v525, %v527
    %v529 = vsel %vm521, %v508, %v511
    %v530 = vsel %vm524, %v517, 920167782
    %v531 = vsel %vm523, %v514, %v530
    %v532 = vsel %vm522, %v529, %v531
    %v533 = vsel %vm521, %v511, %v514
    %v534 = vsel %vm524, %v520, 1326507024
    %v535 = vsel %vm523, %v517, %v534
    %v536 = vsel %vm522, %v533, %v535
    %v537 = vshll.u32 %v497, 8
    %v538 = vmul.u32.u64.compose %v537, %v536
    %v539 = vextract.low.u32 %v538
    %v540 = vextract.high.u32 %v538
    %v541 = vmul.u32.u64.compose %v537, %v532
    %v542 = vextract.low.u32 %v541
    %v543 = vextract.high.u32 %v541
    %v544 = vmul.u32 %v537, %v528
    %v545 = vadd.s32 %v540, %v542
    %vm546 = vc.u32 %v540, %v542
    %v547 = vadd.s32 %v543, 1
    %v548 = vsel %vm546, %v547, %v543
    %v549 = vadd.s32 %v544, %v548
    %v550 = vadd.s32 %v549, 536870912
    %v551 = vshrl.u32 %v550, 30
    %v552 = vshll.u32 %v551, 30
    %v553 = vsub.s32 %v549, %v552
    %vm554 = vcmp.lt.s32.totalorder %v553, 0
    %v555 = vsub.s32 0, %v553
    %v556 = vsel %vm554, %v555, %v553
    %v557 = vclz %v556
    %v558 = vsub.s32 %v557, 2
    %vm559 = vcmp.gt.s32.totalorder 0, %v558
    %v560 = vsel %vm559, 0, %v558
    %v561 = vsub.s32 32, %v560
    %v562 = vshll.u32 %v553, %v560
    %v563 = vshrl.u32 %v545, %v561
    %v564 = vor.u32 %v562, %v563
    %v565 = vsub.s32 4294967266, %v560
    %v566 = vadd.s32 %v565, 127
    %v567 = vshll.u32 %v566, 23
    %v568 = vor.u32 4788187, %v567
    %v569 = vand.u32 2147483647, %v568
    %v571 = vcvt.s32.f32 %v564
    %v572 = vmul.f32 %v571, %v569
    %v573 = vxor.u32 %v572, 2147483648
    %v574 = vsel %vm491, %v573, %v572
    %v575 = vsub.s32 4, %v551
    %v576 = vsel %vm491, %v575, %v551
    %v577 = vsel %vm490, %v488, %v574
    %v578 = vsel %vm490, 0, %v576
    %v579 = vcosq.f32.pop %v577
    %v580 = vsinq.f32.pop %v577
    %vm581 = vweird.f32 %v488
    %v582 = vadd.s32 %v578, 3
    %v583 = vand.u32 %v582, 3
    %vm584 = vcmp.lt.s32.totalorder %v583, 2
    %vm585 = vcmp.eq.s32.totalorder %v583, 0
    %v586 = vxor.u32 %v580, 2147483648
    %v587 = vsel %vm585, %v579, %v586
    %vm588 = vcmp.eq.s32.totalorder %v583, 2
    %v589 = vxor.u32 %v579, 2147483648
    %v590 = vsel %vm588, %v589, %v580
    %v591 = vsel %vm584, %v587, %v590
    %v592 = vsel %vm581, nan, %v591
    %594 = vrot.lane.b32.xlu0 %v592, 64
    %v595 = vpop.permute.xlu0 %594
    %vm597 = vcmask 650752
    %598 = vst.msk [vmem:[#allocation5] sm:$0xf] %vm597, %v595
    %v599 = vand.u32 2147483647, %v488
    %vm600 = vcmp.le.f32.partialorder %v599, 0.7853982
    %vm601 = vcmp.lt.s32.totalorder %v488, 0
    %v602 = vand.u32 %v488, 2139095040
    %v603 = vshrl.u32 %v602, 23
    %v604 = vsub.s32 %v603, 127
    %v605 = vand.u32 2147483647, %v488
    %v606 = vand.u32 %v605, 8388607
    %v607 = vor.u32 %v606, 8388608
    %v608 = vsub.s32 0, %v607
    %v609 = vadd.s32 %v604, 1
    %vm610 = vcmp.gt.s32.totalorder %v609, 0
    %v611 = vsel %vm610, %v609, 0
    %v612 = vshrl.u32 %v611, 5
    %v613 = vand.u32 %v611, 31
    %v614 = vsub.s32 32, %v613
    %v615 = vshrl.u32 683565275, %v614
    %v616 = vshll.u32 683565275, %v613
    %v617 = vshrl.u32 2475754826, %v614
    %v618 = vor.u32 %v616, %v617
    %v619 = vshll.u32 2475754826, %v613
    %v620 = vshrl.u32 2131351028, %v614
    %v621 = vor.u32 %v619, %v620
    %v622 = vshll.u32 2131351028, %v613
    %v623 = vshrl.u32 2102212464, %v614
    %v624 = vor.u32 %v622, %v623
    %v625 = vshll.u32 2102212464, %v613
    %v626 = vshrl.u32 920167782, %v614
    %v627 = vor.u32 %v625, %v626
    %v628 = vshll.u32 920167782, %v613
    %v629 = vshrl.u32 1326507024, %v614
    %v630 = vor.u32 %v628, %v629
    %vm631 = vcmp.lt.s32.totalorder %v612, 1
    %vm632 = vcmp.lt.s32.totalorder %v612, 2
    %vm633 = vcmp.lt.s32.totalorder %v612, 3
    %vm634 = vcmp.lt.s32.totalorder %v612, 4
    %v635 = vsel %vm631, %v615, %v618
    %v636 = vsel %vm634, %v624, 2102212464
    %v637 = vsel %vm633, %v621, %v636
    %v638 = vsel %vm632, %v635, %v637
    %v639 = vsel %vm631, %v618, %v621
    %v640 = vsel %vm634, %v627, 920167782
    %v641 = vsel %vm633, %v624, %v640
    %v642 = vsel %vm632, %v639, %v641
    %v643 = vsel %vm631, %v621, %v624
    %v644 = vsel %vm634, %v630, 1326507024
    %v645 = vsel %vm633, %v627, %v644
    %v646 = vsel %vm632, %v643, %v645
    %v647 = vshll.u32 %v607, 8
    %v648 = vmul.u32.u64.compose %v647, %v646
    %v649 = vextract.low.u32 %v648
    %v650 = vextract.high.u32 %v648
    %v651 = vmul.u32.u64.compose %v647, %v642
    %v652 = vextract.low.u32 %v651
    %v653 = vextract.high.u32 %v651
    %v654 = vmul.u32 %v647, %v638
    %v655 = vadd.s32 %v650, %v652
    %vm656 = vc.u32 %v650, %v652
    %v657 = vadd.s32 %v653, 1
    %v658 = vsel %vm656, %v657, %v653
    %v659 = vadd.s32 %v654, %v658
    %v660 = vadd.s32 %v659, 536870912
    %v661 = vshrl.u32 %v660, 30
    %v662 = vshll.u32 %v661, 30
    %v663 = vsub.s32 %v659, %v662
    %vm664 = vcmp.lt.s32.totalorder %v663, 0
    %v665 = vsub.s32 0, %v663
    %v666 = vsel %vm664, %v665, %v663
    %v667 = vclz %v666
    %v668 = vsub.s32 %v667, 2
    %vm669 = vcmp.gt.s32.totalorder 0, %v668
    %v670 = vsel %vm669, 0, %v668
    %v671 = vsub.s32 32, %v670
    %v672 = vshll.u32 %v663, %v670
    %v673 = vshrl.u32 %v655, %v671
    %v674 = vor.u32 %v672, %v673
    %v675 = vsub.s32 4294967266, %v670
    %v676 = vadd.s32 %v675, 127
    %v677 = vshll.u32 %v676, 23
    %v678 = vor.u32 4788187, %v677
    %v679 = vand.u32 2147483647, %v678
    %v681 = vcvt.s32.f32 %v674
    %v682 = vmul.f32 %v681, %v679
    %v683 = vxor.u32 %v682, 2147483648
    %v684 = vsel %vm601, %v683, %v682
    %v685 = vsub.s32 4, %v661
    %v686 = vsel %vm601, %v685, %v661
    %v687 = vsel %vm600, %v488, %v684
    %v688 = vsel %vm600, 0, %v686
    %v689 = vcosq.f32.pop %v687
    %v690 = vsinq.f32.pop %v687
    %vm691 = vweird.f32 %v488
    %v692 = vand.u32 %v688, 3
    %vm693 = vcmp.lt.s32.totalorder %v692, 2
    %vm694 = vcmp.eq.s32.totalorder %v692, 0
    %v695 = vxor.u32 %v690, 2147483648
    %v696 = vsel %vm694, %v689, %v695
    %vm697 = vcmp.eq.s32.totalorder %v692, 2
    %v698 = vxor.u32 %v689, 2147483648
    %v699 = vsel %vm697, %v698, %v690
    %v700 = vsel %vm693, %v696, %v699
    %v701 = vsel %vm691, nan, %v700
    %703 = vrot.lane.b32.xlu0 %v701, 80
    %v704 = vpop.permute.xlu0 %703
    %vm706 = vcmask 781952
    %707 = vst.msk [vmem:[#allocation5] sm:$0xf] %vm706, %v704
    %v708 = vld [vmem:[#allocation2] sm:$0xf]
    %v709 = vcvt.s32.f32 %v708
    %711 = vset.pattern.permute.xlu0 3
    %712 = vperm.xlu0 %711, %v709
    %v713 = vpop.permute.xlu0 %712
    %v715 = vmul.f32 %v713, %v36
    %v716 = vand.u32 2147483647, %v715
    %vm717 = vcmp.le.f32.partialorder %v716, 0.7853982
    %vm718 = vcmp.lt.s32.totalorder %v715, 0
    %v719 = vand.u32 %v715, 2139095040
    %v720 = vshrl.u32 %v719, 23
    %v721 = vsub.s32 %v720, 127
    %v722 = vand.u32 2147483647, %v715
    %v723 = vand.u32 %v722, 8388607
    %v724 = vor.u32 %v723, 8388608
    %v725 = vsub.s32 0, %v724
    %v726 = vadd.s32 %v721, 1
    %vm727 = vcmp.gt.s32.totalorder %v726, 0
    %v728 = vsel %vm727, %v726, 0
    %v729 = vshrl.u32 %v728, 5
    %v730 = vand.u32 %v728, 31
    %v731 = vsub.s32 32, %v730
    %v732 = vshrl.u32 683565275, %v731
    %v733 = vshll.u32 683565275, %v730
    %v734 = vshrl.u32 2475754826, %v731
    %v735 = vor.u32 %v733, %v734
    %v736 = vshll.u32 2475754826, %v730
    %v737 = vshrl.u32 2131351028, %v731
    %v738 = vor.u32 %v736, %v737
    %v739 = vshll.u32 2131351028, %v730
    %v740 = vshrl.u32 2102212464, %v731
    %v741 = vor.u32 %v739, %v740
    %v742 = vshll.u32 2102212464, %v730
    %v743 = vshrl.u32 920167782, %v731
    %v744 = vor.u32 %v742, %v743
    %v745 = vshll.u32 920167782, %v730
    %v746 = vshrl.u32 1326507024, %v731
    %v747 = vor.u32 %v745, %v746
    %vm748 = vcmp.lt.s32.totalorder %v729, 1
    %vm749 = vcmp.lt.s32.totalorder %v729, 2
    %vm750 = vcmp.lt.s32.totalorder %v729, 3
    %vm751 = vcmp.lt.s32.totalorder %v729, 4
    %v752 = vsel %vm748, %v732, %v735
    %v753 = vsel %vm751, %v741, 2102212464
    %v754 = vsel %vm750, %v738, %v753
    %v755 = vsel %vm749, %v752, %v754
    %v756 = vsel %vm748, %v735, %v738
    %v757 = vsel %vm751, %v744, 920167782
    %v758 = vsel %vm750, %v741, %v757
    %v759 = vsel %vm749, %v756, %v758
    %v760 = vsel %vm748, %v738, %v741
    %v761 = vsel %vm751, %v747, 1326507024
    %v762 = vsel %vm750, %v744, %v761
    %v763 = vsel %vm749, %v760, %v762
    %v764 = vshll.u32 %v724, 8
    %v765 = vmul.u32.u64.compose %v764, %v763
    %v766 = vextract.low.u32 %v765
    %v767 = vextract.high.u32 %v765
    %v768 = vmul.u32.u64.compose %v764, %v759
    %v769 = vextract.low.u32 %v768
    %v770 = vextract.high.u32 %v768
    %v771 = vmul.u32 %v764, %v755
    %v772 = vadd.s32 %v767, %v769
    %vm773 = vc.u32 %v767, %v769
    %v774 = vadd.s32 %v770, 1
    %v775 = vsel %vm773, %v774, %v770
    %v776 = vadd.s32 %v771, %v775
    %v777 = vadd.s32 %v776, 536870912
    %v778 = vshrl.u32 %v777, 30
    %v779 = vshll.u32 %v778, 30
    %v780 = vsub.s32 %v776, %v779
    %vm781 = vcmp.lt.s32.totalorder %v780, 0
    %v782 = vsub.s32 0, %v780
    %v783 = vsel %vm781, %v782, %v780
    %v784 = vclz %v783
    %v785 = vsub.s32 %v784, 2
    %vm786 = vcmp.gt.s32.totalorder 0, %v785
    %v787 = vsel %vm786, 0, %v785
    %v788 = vsub.s32 32, %v787
    %v789 = vshll.u32 %v780, %v787
    %v790 = vshrl.u32 %v772, %v788
    %v791 = vor.u32 %v789, %v790
    %v792 = vsub.s32 4294967266, %v787
    %v793 = vadd.s32 %v792, 127
    %v794 = vshll.u32 %v793, 23
    %v795 = vor.u32 4788187, %v794
    %v796 = vand.u32 2147483647, %v795
    %v798 = vcvt.s32.f32 %v791
    %v799 = vmul.f32 %v798, %v796
    %v800 = vxor.u32 %v799, 2147483648
    %v801 = vsel %vm718, %v800, %v799
    %v802 = vsub.s32 4, %v778
    %v803 = vsel %vm718, %v802, %v778
    %v804 = vsel %vm717, %v715, %v801
    %v805 = vsel %vm717, 0, %v803
    %v806 = vcosq.f32.pop %v804
    %v807 = vsinq.f32.pop %v804
    %vm808 = vweird.f32 %v715
    %v809 = vadd.s32 %v805, 3
    %v810 = vand.u32 %v809, 3
    %vm811 = vcmp.lt.s32.totalorder %v810, 2
    %vm812 = vcmp.eq.s32.totalorder %v810, 0
    %v813 = vxor.u32 %v807, 2147483648
    %v814 = vsel %vm812, %v806, %v813
    %vm815 = vcmp.eq.s32.totalorder %v810, 2
    %v816 = vxor.u32 %v806, 2147483648
    %v817 = vsel %vm815, %v816, %v807
    %v818 = vsel %vm811, %v814, %v817
    %v819 = vsel %vm808, nan, %v818
    %821 = vrot.lane.b32.xlu0 %v819, 96
    %v822 = vpop.permute.xlu0 %821
    %vm824 = vcmask 913152
    %825 = vst.msk [vmem:[#allocation5] sm:$0xf] %vm824, %v822
    %v826 = vand.u32 2147483647, %v715
    %vm827 = vcmp.le.f32.partialorder %v826, 0.7853982
    %vm828 = vcmp.lt.s32.totalorder %v715, 0
    %v829 = vand.u32 %v715, 2139095040
    %v830 = vshrl.u32 %v829, 23
    %v831 = vsub.s32 %v830, 127
    %v832 = vand.u32 2147483647, %v715
    %v833 = vand.u32 %v832, 8388607
    %v834 = vor.u32 %v833, 8388608
    %v835 = vsub.s32 0, %v834
    %v836 = vadd.s32 %v831, 1
    %vm837 = vcmp.gt.s32.totalorder %v836, 0
    %v838 = vsel %vm837, %v836, 0
    %v839 = vshrl.u32 %v838, 5
    %v840 = vand.u32 %v838, 31
    %v841 = vsub.s32 32, %v840
    %v842 = vshrl.u32 683565275, %v841
    %v843 = vshll.u32 683565275, %v840
    %v844 = vshrl.u32 2475754826, %v841
    %v845 = vor.u32 %v843, %v844
    %v846 = vshll.u32 2475754826, %v840
    %v847 = vshrl.u32 2131351028, %v841
    %v848 = vor.u32 %v846, %v847
    %v849 = vshll.u32 2131351028, %v840
    %v850 = vshrl.u32 2102212464, %v841
    %v851 = vor.u32 %v849, %v850
    %v852 = vshll.u32 2102212464, %v840
    %v853 = vshrl.u32 920167782, %v841
    %v854 = vor.u32 %v852, %v853
    %v855 = vshll.u32 920167782, %v840
    %v856 = vshrl.u32 1326507024, %v841
    %v857 = vor.u32 %v855, %v856
    %vm858 = vcmp.lt.s32.totalorder %v839, 1
    %vm859 = vcmp.lt.s32.totalorder %v839, 2
    %vm860 = vcmp.lt.s32.totalorder %v839, 3
    %vm861 = vcmp.lt.s32.totalorder %v839, 4
    %v862 = vsel %vm858, %v842, %v845
    %v863 = vsel %vm861, %v851, 2102212464
    %v864 = vsel %vm860, %v848, %v863
    %v865 = vsel %vm859, %v862, %v864
    %v866 = vsel %vm858, %v845, %v848
    %v867 = vsel %vm861, %v854, 920167782
    %v868 = vsel %vm860, %v851, %v867
    %v869 = vsel %vm859, %v866, %v868
    %v870 = vsel %vm858, %v848, %v851
    %v871 = vsel %vm861, %v857, 1326507024
    %v872 = vsel %vm860, %v854, %v871
    %v873 = vsel %vm859, %v870, %v872
    %v874 = vshll.u32 %v834, 8
    %v875 = vmul.u32.u64.compose %v874, %v873
    %v876 = vextract.low.u32 %v875
    %v877 = vextract.high.u32 %v875
    %v878 = vmul.u32.u64.compose %v874, %v869
    %v879 = vextract.low.u32 %v878
    %v880 = vextract.high.u32 %v878
    %v881 = vmul.u32 %v874, %v865
    %v882 = vadd.s32 %v877, %v879
    %vm883 = vc.u32 %v877, %v879
    %v884 = vadd.s32 %v880, 1
    %v885 = vsel %vm883, %v884, %v880
    %v886 = vadd.s32 %v881, %v885
    %v887 = vadd.s32 %v886, 536870912
    %v888 = vshrl.u32 %v887, 30
    %v889 = vshll.u32 %v888, 30
    %v890 = vsub.s32 %v886, %v889
    %vm891 = vcmp.lt.s32.totalorder %v890, 0
    %v892 = vsub.s32 0, %v890
    %v893 = vsel %vm891, %v892, %v890
    %v894 = vclz %v893
    %v895 = vsub.s32 %v894, 2
    %vm896 = vcmp.gt.s32.totalorder 0, %v895
    %v897 = vsel %vm896, 0, %v895
    %v898 = vsub.s32 32, %v897
    %v899 = vshll.u32 %v890, %v897
    %v900 = vshrl.u32 %v882, %v898
    %v901 = vor.u32 %v899, %v900
    %v902 = vsub.s32 4294967266, %v897
    %v903 = vadd.s32 %v902, 127
    %v904 = vshll.u32 %v903, 23
    %v905 = vor.u32 4788187, %v904
    %v906 = vand.u32 2147483647, %v905
    %v908 = vcvt.s32.f32 %v901
    %v909 = vmul.f32 %v908, %v906
    %v910 = vxor.u32 %v909, 2147483648
    %v911 = vsel %vm828, %v910, %v909
    %v912 = vsub.s32 4, %v888
    %v913 = vsel %vm828, %v912, %v888
    %v914 = vsel %vm827, %v715, %v911
    %v915 = vsel %vm827, 0, %v913
    %v916 = vcosq.f32.pop %v914
    %v917 = vsinq.f32.pop %v914
    %vm918 = vweird.f32 %v715
    %v919 = vand.u32 %v915, 3
    %vm920 = vcmp.lt.s32.totalorder %v919, 2
    %vm921 = vcmp.eq.s32.totalorder %v919, 0
    %v922 = vxor.u32 %v917, 2147483648
    %v923 = vsel %vm921, %v916, %v922
    %vm924 = vcmp.eq.s32.totalorder %v919, 2
    %v925 = vxor.u32 %v916, 2147483648
    %v926 = vsel %vm924, %v925, %v917
    %v927 = vsel %vm920, %v923, %v926
    %v928 = vsel %vm918, nan, %v927
    %930 = vrot.lane.b32.xlu0 %v928, 112
    %v931 = vpop.permute.xlu0 %930
    %vm933 = vcmask 1044352
    %934 = vst.msk [vmem:[#allocation5] sm:$0xf] %vm933, %v931
    // Predicated region
    $region14: #{tpu_custom_call.1} parent=1 // pred_check
      _
    $region15: #{tpu_custom_call.1} parent=1 // pred_check_branch
      %936 = sbr.rel (0) target = $region17
    $region16: #{tpu_custom_call.1} parent=1 // pred_region
      %s938 = ssub.s32 64, 64
      %939 = vsyncadd [#allocation4], %s938
      %s941 = sshll.u32 [#allocation5], 4
      %s942 = int_to_ptr.vmem [resolvable:$true] %s941
      %944 = dma.vmem_to_hbm [thread:$0]  %s942, 64, %s2, [#allocation4]
    $region17: #{tpu_custom_call.1} parent=1 // pred_fallthru
      _
    // Predicated region
    $region18: #{tpu_custom_call.1} parent=1 // pred_check
      _
    $region19: #{tpu_custom_call.1} parent=1 // pred_check_branch
      %946 = sbr.rel (0) target = $region21
    $region20: #{tpu_custom_call.1} parent=1 // pred_region
      %947 = dma.done [#allocation4], 64
    $region21: #{tpu_custom_call.1} parent=1 // pred_fallthru
      _
    %948 = vsyncpa [#allocation3], 1
    %949 = vsyncpa [#allocation4], 1

</llo_original>
